<compile_context>
chip_gen: v6e
topology: v6e:2x2x1
jax: 0.10.0
libtpu: 0.0.40
codegen_flags: <defaults>
</compile_context>

<pallas_src>
from functools import partial

import numpy as np
import jax
import jax.numpy as jnp
from jax.experimental import pallas as pl
from jax.experimental.pallas import tpu as pltpu

# NumPy 2.x renamed trapz -> trapezoid.
_trapz = getattr(np, "trapezoid", None)
if _trapz is None:  # pragma: no cover
    _trapz = np.trapz


# ----------------------------------------------------------------------------
# Pallas kernel: decode stacked target/output channel planes into
# [cls, conf, x1, y1, x2, y2] planes (lane axis = flattened cell index).
# ----------------------------------------------------------------------------
def _make_decode_kernel(S, B, C, W, H, use_sigmoid):
    grid_w = float(W) / float(S)
    grid_h = float(H) / float(S)
    half_w = 0.5 * float(W)
    half_h = 0.5 * float(H)

    def kernel(x_ref, rc_ref, box_ref):
        # x_ref:   (2, B*5+C, 8, bc)   [0]=target, [1]=output (raw logits)
        # rc_ref:  (2, 8, bc)          [0]=row index i, [1]=col index j (f32)
        # box_ref: (2, 6, 8, bc)       [0]=target boxes, [1]=output boxes
        row = rc_ref[0]
        col = rc_ref[1]

        def class_argmax(src):
            # streaming argmax over the C class planes; first max wins ties
            best = x_ref[src, B * 5]
            best_idx = jnp.zeros_like(best)
            for c in range(1, C):
                cur = x_ref[src, B * 5 + c]
                take = cur > best
                best_idx = jnp.where(take, jnp.float32(c), best_idx)
                best = jnp.where(take, cur, best)
            return best_idx

        # ------------------ target boxes (no sigmoid on targets) -----------
        t_cx = (x_ref[0, 0] + col) * grid_w
        t_cy = (x_ref[0, 1] + row) * grid_h
        t_hw = x_ref[0, 2] * half_w
        t_hh = x_ref[0, 3] * half_h
        box_ref[0, 0] = class_argmax(0)
        box_ref[0, 1] = x_ref[0, 4]
        box_ref[0, 2] = t_cx - t_hw
        box_ref[0, 3] = t_cy - t_hh
        box_ref[0, 4] = t_cx + t_hw
        box_ref[0, 5] = t_cy + t_hh

        # ------------------ output boxes ------------------------------------
        # Responsible-box selection on RAW logits (sigmoid is strictly
        # monotone, so the max over B is unchanged); carry the selected
        # coords directly instead of rebuilding (resp == b) masks.
        conf = x_ref[1, 4]
        bx = x_ref[1, 0]
        by = x_ref[1, 1]
        bw = x_ref[1, 2]
        bh = x_ref[1, 3]
        for b in range(1, B):
            cb = x_ref[1, b * 5 + 4]
            take = cb > conf
            bx = jnp.where(take, x_ref[1, b * 5 + 0], bx)
            by = jnp.where(take, x_ref[1, b * 5 + 1], by)
            bw = jnp.where(take, x_ref[1, b * 5 + 2], bw)
            bh = jnp.where(take, x_ref[1, b * 5 + 3], bh)
            conf = jnp.where(take, cb, conf)

        o_cls = class_argmax(1)  # argmax invariant under sigmoid

        if use_sigmoid:
            # only the 5 kept planes need the transcendental (EUP slot)
            conf = jax.nn.sigmoid(conf)
            bx = jax.nn.sigmoid(bx)
            by = jax.nn.sigmoid(by)
            bw = jax.nn.sigmoid(bw)
            bh = jax.nn.sigmoid(bh)

        o_cx = (bx + col) * grid_w
        o_cy = (by + row) * grid_h
        o_hw = bw * half_w
        o_hh = bh * half_h
        box_ref[1, 0] = o_cls
        box_ref[1, 1] = conf
        box_ref[1, 2] = o_cx - o_hw
        box_ref[1, 3] = o_cy - o_hh
        box_ref[1, 4] = o_cx + o_hw
        box_ref[1, 5] = o_cy + o_hh

    return kernel


# ----------------------------------------------------------------------------
# Device-side wrapper: layout plumbing + pallas_call (fused under one jit).
# ----------------------------------------------------------------------------
@partial(jax.jit, static_argnames=("S", "B", "C", "W", "H", "use_sigmoid"))
def _decode_device(target, output, *, S, B, C, W, H, use_sigmoid):
    D = B * 5 + C
    N = target.shape[0]
    ncells = N * S * S

    # Pad the flattened cell axis so each channel plane is a whole
    # (8, 128*k) vreg slab; split into at most 4096-cell grid steps for
    # large eval batches (keeps the per-step block well inside VMEM while
    # amortizing per-step overhead).
    cells_per_step = 8 * 512
    if ncells > cells_per_step:
        nblk = -(-ncells // cells_per_step)
        cp = nblk * cells_per_step
        block_cols = cells_per_step // 8
    else:
        cp = -(-ncells // 1024) * 1024
        nblk = 1
        block_cols = cp // 8
    cols = cp // 8

    # One stacked input stream: (2, D, 8, cols), channel planes lane-dense.
    x = jnp.stack([target, output], axis=0).reshape(2, ncells, D)
    x = jnp.pad(x, ((0, 0), (0, cp - ncells), (0, 0)))
    x = jnp.transpose(x, (0, 2, 1)).reshape(2, D, 8, cols)

    # Per-cell grid row/col indices, laid out identically to the cell axis
    # (computed by XLA on-device under the same jit; trivially small).
    m = jnp.arange(cp, dtype=jnp.int32)
    col_idx = (m % S).astype(jnp.float32)
    row_idx = ((m // S) % S).astype(jnp.float32)
    rc = jnp.stack([row_idx, col_idx], axis=0).reshape(2, 8, cols)

    kernel = _make_decode_kernel(S, B, C, W, H, use_sigmoid)
    boxes = pl.pallas_call(
        kernel,
        out_shape=jax.ShapeDtypeStruct((2, 6, 8, cols), jnp.float32),
        grid_spec=pltpu.PrefetchScalarGridSpec(
            num_scalar_prefetch=0,
            grid=(nblk,),
            in_specs=[
                pl.BlockSpec((2, D, 8, block_cols), lambda g: (0, 0, 0, g)),
                pl.BlockSpec((2, 8, block_cols), lambda g: (0, 0, g)),
            ],
            out_specs=pl.BlockSpec((2, 6, 8, block_cols),
                                   lambda g: (0, 0, 0, g)),
        ),
        compiler_params=pltpu.CompilerParams(
            dimension_semantics=("parallel",)),
    )(x, rc)
    return boxes


def decode_boxes_pallas(target, output, *, S=7, B=2, C=20, W=448, H=448,
                        sigmoid=True):
    """Returns (target_boxes, output_boxes), each (N, S, S, 6) float32 NumPy
    arrays with channels [class_idx, conf, x1, y1, x2, y2]."""
    D = B * 5 + C
    target = jnp.asarray(target, jnp.float32).reshape(-1, S, S, D)
    output = jnp.asarray(output, jnp.float32).reshape(-1, S, S, D)
    N = target.shape[0]
    ncells = N * S * S

    boxes = _decode_device(target, output, S=S, B=B, C=C, W=W, H=H,
                           use_sigmoid=sigmoid)
    jax.block_until_ready(boxes)

    # Back-permute on the host (tiny; the data is consumed by NumPy anyway).
    boxes_np = np.asarray(boxes)                               # (2, 6, 8, cols)
    cols = boxes_np.shape[-1]
    flat = boxes_np.reshape(2, 6, 8 * cols)[:, :, :ncells]     # (2, 6, NCells)
    flat = np.transpose(flat, (0, 2, 1)).reshape(2, N, S, S, 6)
    return flat[0], flat[1]


# ----------------------------------------------------------------------------
# Host-side mAP bookkeeping (NMS / greedy matching) — data-dependent Python
# control flow, no clean Pallas equivalent.
# ----------------------------------------------------------------------------
# TODO(synk): per-image NMS + greedy TP/FP matching is variable-length,
# data-dependent control flow; kept on the host in NumPy.
def _box_iou_np(a, b):
    area_a = (a[:, 2] - a[:, 0]) * (a[:, 3] - a[:, 1])
    area_b = (b[:, 2] - b[:, 0]) * (b[:, 3] - b[:, 1])
    lt = np.maximum(a[:, None, :2], b[None, :, :2])
    rb = np.minimum(a[:, None, 2:], b[None, :, 2:])
    wh = np.clip(rb - lt, 0.0, None)
    inter = wh[..., 0] * wh[..., 1]
    return inter / (area_a[:, None] + area_b[None, :] - inter)


def _nms_np(boxes, scores, thr):
    order = np.argsort(-scores, kind="stable")
    keep = []
    while order.size > 0:
        i = int(order[0])
        keep.append(i)
        if order.size == 1:
            break
        ious = _box_iou_np(boxes[i:i + 1], boxes[order[1:]])[0]
        order = order[1:][ious <= thr]
    return np.asarray(keep, dtype=np.int64)


def _batched_nms_np(boxes, scores, idxs, thr):
    if boxes.shape[0] == 0:
        return np.zeros((0,), dtype=np.int64)
    max_c = boxes.max()
    offsets = idxs * (max_c + 1.0)
    return _nms_np(boxes + offsets[:, None], scores, thr)


def yolov1_acc(target, output, *, S=7, B=2, C=20, W=448, H=448,
               conf_thres=0.5, nms_thres=0.5, iou_thres=0.5, sigmoid=True):
    tboxes, oboxes = decode_boxes_pallas(target, output, S=S, B=B, C=C,
                                         W=W, H=H, sigmoid=sigmoid)
    tboxes = np.asarray(tboxes, dtype=np.float64)
    oboxes = np.asarray(oboxes, dtype=np.float64)
    batch = tboxes.shape[0]

    gt_boxes, pred_boxes = [], []
    for img_id in range(batch):
        tb = tboxes[img_id].reshape(-1, 6)
        for box in tb:
            if box[1] > conf_thres:
                gt_boxes.append([img_id] + [float(x) for x in box])
        ob = oboxes[img_id].reshape(-1, 6)
        keep = _batched_nms_np(ob[:, 2:], ob[:, 1], ob[:, 0], nms_thres)
        for box in ob[keep]:
            if box[1] > conf_thres:
                pred_boxes.append([img_id] + [float(x) for x in box])

    iou_thres_list = iou_thres if isinstance(iou_thres, list) else [iou_thres]
    res = []
    for iou_thre in iou_thres_list:
        average_precisions = []
        for c in range(C):
            same_cls_gts = [b for b in gt_boxes if int(b[1]) == c]
            same_cls_preds = [b for b in pred_boxes if int(b[1]) == c]
            amount = {}
            for b in same_cls_gts:
                amount[b[0]] = amount.get(b[0], 0) + 1
            amount = {k: np.zeros(v) for k, v in amount.items()}
            TP = np.zeros(len(same_cls_preds))
            FP = np.zeros(len(same_cls_preds))
            total_true = len(same_cls_gts)
            if total_true == 0:
                continue
            for pid, pred in enumerate(same_cls_preds):
                sel = [b for b in same_cls_gts if b[0] == pred[0]]
                max_iou, best_idx = 0.0, -1
                p = np.asarray(pred[3:], dtype=np.float64)[None]
                for gidx, gt in enumerate(sel):
                    iou = float(_box_iou_np(
                        p, np.asarray(gt[3:], dtype=np.float64)[None])[0, 0])
                    if iou > max_iou:
                        max_iou, best_idx = iou, gidx
                if max_iou > iou_thre:
                    if amount[pred[0]][best_idx] == 0:
                        TP[pid] = 1
                        amount[pred[0]][best_idx] = 1
                    else:
                        FP[pid] = 1
                else:
                    FP[pid] = 1
            tpc = np.cumsum(TP)
            fpc = np.cumsum(FP)
            recall = tpc / (total_true + 1e-6)
            precision = tpc / (tpc + fpc + 1e-6)
            precision = np.concatenate(([1.0], precision))
            recall = np.concatenate(([0.0], recall))
            average_precisions.append(_trapz(precision, recall))
        # reference divides unconditionally; guard against the empty case
        if average_precisions:
            res.append(sum(average_precisions) / len(average_precisions))
        else:
            res.append(0.0)
    return sum(res) / len(res)


if __name__ == "__main__":
    S, B, C = 7, 2, 20
    D = B * 5 + C
    batch = 2

    key = jax.random.PRNGKey(0)
    k1, k2 = jax.random.split(key)
    # target: YOLO-style ground-truth tensor in [0, 1)
    target = jax.random.uniform(k1, (batch, S, S, D), dtype=jnp.float32)
    # output: raw network logits (sigmoid is applied inside the kernel)
    output = jax.random.normal(k2, (batch, S, S, D), dtype=jnp.float32)

    # Run the Pallas decode kernel once and block on it.
    boxes = _decode_device(target, output, S=S, B=B, C=C, W=448, H=448,
                           use_sigmoid=True)
    jax.block_until_ready(boxes)

    # Full metric (kernel decode + host-side NMS / AP), mirroring the module.
    _map_value = yolov1_acc(target, output, S=S, B=B, C=C)

    print("KERNEL_OK")
</pallas_src>

<mosaic_0001>
module attributes {stable_mosaic.version = 11 : i64} {
  func.func @kernel(%arg0: i32, %arg1: memref<2x30x8x128xf32, #tpu.memory_space<vmem>>, %arg2: memref<2x8x128xf32, #tpu.memory_space<vmem>>, %arg3: memref<2x6x8x128xf32, #tpu.memory_space<vmem>>) attributes {dimension_semantics = [#tpu.dimension_semantics<parallel>], iteration_bounds = array<i64: 1>, scalar_prefetch = 0 : i64, scratch_operands = 0 : i64, tpu.core_type = #tpu.core_type<tc>, window_params = [{transform_indices = @transform_0, window_bounds = array<i64: 2, 30, 8, 128>}, {transform_indices = @transform_1, window_bounds = array<i64: 2, 8, 128>}, {transform_indices = @transform_2, window_bounds = array<i64: 2, 6, 8, 128>}]} {
    %c0 = arith.constant 0 : index
    %c0_0 = arith.constant 0 : index
    %c0_1 = arith.constant 0 : index
    %0 = vector.load %arg2[%c0, %c0_0, %c0_1] : memref<2x8x128xf32, #tpu.memory_space<vmem>>, vector<1x8x128xf32>
    %1 = vector.shape_cast %0 : vector<1x8x128xf32> to vector<8x128xf32>
    %c1 = arith.constant 1 : index
    %c0_2 = arith.constant 0 : index
    %c0_3 = arith.constant 0 : index
    %2 = vector.load %arg2[%c1, %c0_2, %c0_3] : memref<2x8x128xf32, #tpu.memory_space<vmem>>, vector<1x8x128xf32>
    %3 = vector.shape_cast %2 : vector<1x8x128xf32> to vector<8x128xf32>
    %c0_4 = arith.constant 0 : index
    %c0_5 = arith.constant 0 : index
    %c0_6 = arith.constant 0 : index
    %c0_7 = arith.constant 0 : index
    %4 = vector.load %arg1[%c0_4, %c0_5, %c0_6, %c0_7] : memref<2x30x8x128xf32, #tpu.memory_space<vmem>>, vector<1x1x8x128xf32>
    %5 = vector.shape_cast %4 : vector<1x1x8x128xf32> to vector<8x128xf32>
    %6 = arith.addf %5, %3 : vector<8x128xf32>
    %cst = arith.constant 6.400000e+01 : f32
    %7 = vector.broadcast %cst : f32 to vector<8x128xf32>
    %8 = arith.mulf %6, %7 : vector<8x128xf32>
    %c0_8 = arith.constant 0 : index
    %c1_9 = arith.constant 1 : index
    %c0_10 = arith.constant 0 : index
    %c0_11 = arith.constant 0 : index
    %9 = vector.load %arg1[%c0_8, %c1_9, %c0_10, %c0_11] : memref<2x30x8x128xf32, #tpu.memory_space<vmem>>, vector<1x1x8x128xf32>
    %10 = vector.shape_cast %9 : vector<1x1x8x128xf32> to vector<8x128xf32>
    %11 = arith.addf %10, %1 : vector<8x128xf32>
    %cst_12 = arith.constant 6.400000e+01 : f32
    %12 = vector.broadcast %cst_12 : f32 to vector<8x128xf32>
    %13 = arith.mulf %11, %12 : vector<8x128xf32>
    %c0_13 = arith.constant 0 : index
    %c2 = arith.constant 2 : index
    %c0_14 = arith.constant 0 : index
    %c0_15 = arith.constant 0 : index
    %14 = vector.load %arg1[%c0_13, %c2, %c0_14, %c0_15] : memref<2x30x8x128xf32, #tpu.memory_space<vmem>>, vector<1x1x8x128xf32>
    %15 = vector.shape_cast %14 : vector<1x1x8x128xf32> to vector<8x128xf32>
    %cst_16 = arith.constant 2.240000e+02 : f32
    %16 = vector.broadcast %cst_16 : f32 to vector<8x128xf32>
    %17 = arith.mulf %15, %16 : vector<8x128xf32>
    %c0_17 = arith.constant 0 : index
    %c3 = arith.constant 3 : index
    %c0_18 = arith.constant 0 : index
    %c0_19 = arith.constant 0 : index
    %18 = vector.load %arg1[%c0_17, %c3, %c0_18, %c0_19] : memref<2x30x8x128xf32, #tpu.memory_space<vmem>>, vector<1x1x8x128xf32>
    %19 = vector.shape_cast %18 : vector<1x1x8x128xf32> to vector<8x128xf32>
    %cst_20 = arith.constant 2.240000e+02 : f32
    %20 = vector.broadcast %cst_20 : f32 to vector<8x128xf32>
    %21 = arith.mulf %19, %20 : vector<8x128xf32>
    %c0_21 = arith.constant 0 : index
    %c10 = arith.constant 10 : index
    %c0_22 = arith.constant 0 : index
    %c0_23 = arith.constant 0 : index
    %22 = vector.load %arg1[%c0_21, %c10, %c0_22, %c0_23] : memref<2x30x8x128xf32, #tpu.memory_space<vmem>>, vector<1x1x8x128xf32>
    %23 = vector.shape_cast %22 : vector<1x1x8x128xf32> to vector<8x128xf32>
    %cst_24 = arith.constant 0.000000e+00 : f32
    %24 = vector.broadcast %cst_24 : f32 to vector<8x128xf32>
    %c0_25 = arith.constant 0 : index
    %c11 = arith.constant 11 : index
    %c0_26 = arith.constant 0 : index
    %c0_27 = arith.constant 0 : index
    %25 = vector.load %arg1[%c0_25, %c11, %c0_26, %c0_27] : memref<2x30x8x128xf32, #tpu.memory_space<vmem>>, vector<1x1x8x128xf32>
    %26 = vector.shape_cast %25 : vector<1x1x8x128xf32> to vector<8x128xf32>
    %27 = arith.cmpf ogt, %26, %23 : vector<8x128xf32>
    %cst_28 = arith.constant 1.000000e+00 : f32
    %28 = vector.broadcast %cst_28 : f32 to vector<8x128xf32>
    %29 = arith.select %27, %28, %24 : vector<8x128xi1>, vector<8x128xf32>
    %30 = arith.select %27, %26, %23 : vector<8x128xi1>, vector<8x128xf32>
    %c0_29 = arith.constant 0 : index
    %c12 = arith.constant 12 : index
    %c0_30 = arith.constant 0 : index
    %c0_31 = arith.constant 0 : index
    %31 = vector.load %arg1[%c0_29, %c12, %c0_30, %c0_31] : memref<2x30x8x128xf32, #tpu.memory_space<vmem>>, vector<1x1x8x128xf32>
    %32 = vector.shape_cast %31 : vector<1x1x8x128xf32> to vector<8x128xf32>
    %33 = arith.cmpf ogt, %32, %30 : vector<8x128xf32>
    %cst_32 = arith.constant 2.000000e+00 : f32
    %34 = vector.broadcast %cst_32 : f32 to vector<8x128xf32>
    %35 = arith.select %33, %34, %29 : vector<8x128xi1>, vector<8x128xf32>
    %36 = arith.select %33, %32, %30 : vector<8x128xi1>, vector<8x128xf32>
    %c0_33 = arith.constant 0 : index
    %c13 = arith.constant 13 : index
    %c0_34 = arith.constant 0 : index
    %c0_35 = arith.constant 0 : index
    %37 = vector.load %arg1[%c0_33, %c13, %c0_34, %c0_35] : memref<2x30x8x128xf32, #tpu.memory_space<vmem>>, vector<1x1x8x128xf32>
    %38 = vector.shape_cast %37 : vector<1x1x8x128xf32> to vector<8x128xf32>
    %39 = arith.cmpf ogt, %38, %36 : vector<8x128xf32>
    %cst_36 = arith.constant 3.000000e+00 : f32
    %40 = vector.broadcast %cst_36 : f32 to vector<8x128xf32>
    %41 = arith.select %39, %40, %35 : vector<8x128xi1>, vector<8x128xf32>
    %42 = arith.select %39, %38, %36 : vector<8x128xi1>, vector<8x128xf32>
    %c0_37 = arith.constant 0 : index
    %c14 = arith.constant 14 : index
    %c0_38 = arith.constant 0 : index
    %c0_39 = arith.constant 0 : index
    %43 = vector.load %arg1[%c0_37, %c14, %c0_38, %c0_39] : memref<2x30x8x128xf32, #tpu.memory_space<vmem>>, vector<1x1x8x128xf32>
    %44 = vector.shape_cast %43 : vector<1x1x8x128xf32> to vector<8x128xf32>
    %45 = arith.cmpf ogt, %44, %42 : vector<8x128xf32>
    %cst_40 = arith.constant 4.000000e+00 : f32
    %46 = vector.broadcast %cst_40 : f32 to vector<8x128xf32>
    %47 = arith.select %45, %46, %41 : vector<8x128xi1>, vector<8x128xf32>
    %48 = arith.select %45, %44, %42 : vector<8x128xi1>, vector<8x128xf32>
    %c0_41 = arith.constant 0 : index
    %c15 = arith.constant 15 : index
    %c0_42 = arith.constant 0 : index
    %c0_43 = arith.constant 0 : index
    %49 = vector.load %arg1[%c0_41, %c15, %c0_42, %c0_43] : memref<2x30x8x128xf32, #tpu.memory_space<vmem>>, vector<1x1x8x128xf32>
    %50 = vector.shape_cast %49 : vector<1x1x8x128xf32> to vector<8x128xf32>
    %51 = arith.cmpf ogt, %50, %48 : vector<8x128xf32>
    %cst_44 = arith.constant 5.000000e+00 : f32
    %52 = vector.broadcast %cst_44 : f32 to vector<8x128xf32>
    %53 = arith.select %51, %52, %47 : vector<8x128xi1>, vector<8x128xf32>
    %54 = arith.select %51, %50, %48 : vector<8x128xi1>, vector<8x128xf32>
    %c0_45 = arith.constant 0 : index
    %c16 = arith.constant 16 : index
    %c0_46 = arith.constant 0 : index
    %c0_47 = arith.constant 0 : index
    %55 = vector.load %arg1[%c0_45, %c16, %c0_46, %c0_47] : memref<2x30x8x128xf32, #tpu.memory_space<vmem>>, vector<1x1x8x128xf32>
    %56 = vector.shape_cast %55 : vector<1x1x8x128xf32> to vector<8x128xf32>
    %57 = arith.cmpf ogt, %56, %54 : vector<8x128xf32>
    %cst_48 = arith.constant 6.000000e+00 : f32
    %58 = vector.broadcast %cst_48 : f32 to vector<8x128xf32>
    %59 = arith.select %57, %58, %53 : vector<8x128xi1>, vector<8x128xf32>
    %60 = arith.select %57, %56, %54 : vector<8x128xi1>, vector<8x128xf32>
    %c0_49 = arith.constant 0 : index
    %c17 = arith.constant 17 : index
    %c0_50 = arith.constant 0 : index
    %c0_51 = arith.constant 0 : index
    %61 = vector.load %arg1[%c0_49, %c17, %c0_50, %c0_51] : memref<2x30x8x128xf32, #tpu.memory_space<vmem>>, vector<1x1x8x128xf32>
    %62 = vector.shape_cast %61 : vector<1x1x8x128xf32> to vector<8x128xf32>
    %63 = arith.cmpf ogt, %62, %60 : vector<8x128xf32>
    %cst_52 = arith.constant 7.000000e+00 : f32
    %64 = vector.broadcast %cst_52 : f32 to vector<8x128xf32>
    %65 = arith.select %63, %64, %59 : vector<8x128xi1>, vector<8x128xf32>
    %66 = arith.select %63, %62, %60 : vector<8x128xi1>, vector<8x128xf32>
    %c0_53 = arith.constant 0 : index
    %c18 = arith.constant 18 : index
    %c0_54 = arith.constant 0 : index
    %c0_55 = arith.constant 0 : index
    %67 = vector.load %arg1[%c0_53, %c18, %c0_54, %c0_55] : memref<2x30x8x128xf32, #tpu.memory_space<vmem>>, vector<1x1x8x128xf32>
    %68 = vector.shape_cast %67 : vector<1x1x8x128xf32> to vector<8x128xf32>
    %69 = arith.cmpf ogt, %68, %66 : vector<8x128xf32>
    %cst_56 = arith.constant 8.000000e+00 : f32
    %70 = vector.broadcast %cst_56 : f32 to vector<8x128xf32>
    %71 = arith.select %69, %70, %65 : vector<8x128xi1>, vector<8x128xf32>
    %72 = arith.select %69, %68, %66 : vector<8x128xi1>, vector<8x128xf32>
    %c0_57 = arith.constant 0 : index
    %c19 = arith.constant 19 : index
    %c0_58 = arith.constant 0 : index
    %c0_59 = arith.constant 0 : index
    %73 = vector.load %arg1[%c0_57, %c19, %c0_58, %c0_59] : memref<2x30x8x128xf32, #tpu.memory_space<vmem>>, vector<1x1x8x128xf32>
    %74 = vector.shape_cast %73 : vector<1x1x8x128xf32> to vector<8x128xf32>
    %75 = arith.cmpf ogt, %74, %72 : vector<8x128xf32>
    %cst_60 = arith.constant 9.000000e+00 : f32
    %76 = vector.broadcast %cst_60 : f32 to vector<8x128xf32>
    %77 = arith.select %75, %76, %71 : vector<8x128xi1>, vector<8x128xf32>
    %78 = arith.select %75, %74, %72 : vector<8x128xi1>, vector<8x128xf32>
    %c0_61 = arith.constant 0 : index
    %c20 = arith.constant 20 : index
    %c0_62 = arith.constant 0 : index
    %c0_63 = arith.constant 0 : index
    %79 = vector.load %arg1[%c0_61, %c20, %c0_62, %c0_63] : memref<2x30x8x128xf32, #tpu.memory_space<vmem>>, vector<1x1x8x128xf32>
    %80 = vector.shape_cast %79 : vector<1x1x8x128xf32> to vector<8x128xf32>
    %81 = arith.cmpf ogt, %80, %78 : vector<8x128xf32>
    %cst_64 = arith.constant 1.000000e+01 : f32
    %82 = vector.broadcast %cst_64 : f32 to vector<8x128xf32>
    %83 = arith.select %81, %82, %77 : vector<8x128xi1>, vector<8x128xf32>
    %84 = arith.select %81, %80, %78 : vector<8x128xi1>, vector<8x128xf32>
    %c0_65 = arith.constant 0 : index
    %c21 = arith.constant 21 : index
    %c0_66 = arith.constant 0 : index
    %c0_67 = arith.constant 0 : index
    %85 = vector.load %arg1[%c0_65, %c21, %c0_66, %c0_67] : memref<2x30x8x128xf32, #tpu.memory_space<vmem>>, vector<1x1x8x128xf32>
    %86 = vector.shape_cast %85 : vector<1x1x8x128xf32> to vector<8x128xf32>
    %87 = arith.cmpf ogt, %86, %84 : vector<8x128xf32>
    %cst_68 = arith.constant 1.100000e+01 : f32
    %88 = vector.broadcast %cst_68 : f32 to vector<8x128xf32>
    %89 = arith.select %87, %88, %83 : vector<8x128xi1>, vector<8x128xf32>
    %90 = arith.select %87, %86, %84 : vector<8x128xi1>, vector<8x128xf32>
    %c0_69 = arith.constant 0 : index
    %c22 = arith.constant 22 : index
    %c0_70 = arith.constant 0 : index
    %c0_71 = arith.constant 0 : index
    %91 = vector.load %arg1[%c0_69, %c22, %c0_70, %c0_71] : memref<2x30x8x128xf32, #tpu.memory_space<vmem>>, vector<1x1x8x128xf32>
    %92 = vector.shape_cast %91 : vector<1x1x8x128xf32> to vector<8x128xf32>
    %93 = arith.cmpf ogt, %92, %90 : vector<8x128xf32>
    %cst_72 = arith.constant 1.200000e+01 : f32
    %94 = vector.broadcast %cst_72 : f32 to vector<8x128xf32>
    %95 = arith.select %93, %94, %89 : vector<8x128xi1>, vector<8x128xf32>
    %96 = arith.select %93, %92, %90 : vector<8x128xi1>, vector<8x128xf32>
    %c0_73 = arith.constant 0 : index
    %c23 = arith.constant 23 : index
    %c0_74 = arith.constant 0 : index
    %c0_75 = arith.constant 0 : index
    %97 = vector.load %arg1[%c0_73, %c23, %c0_74, %c0_75] : memref<2x30x8x128xf32, #tpu.memory_space<vmem>>, vector<1x1x8x128xf32>
    %98 = vector.shape_cast %97 : vector<1x1x8x128xf32> to vector<8x128xf32>
    %99 = arith.cmpf ogt, %98, %96 : vector<8x128xf32>
    %cst_76 = arith.constant 1.300000e+01 : f32
    %100 = vector.broadcast %cst_76 : f32 to vector<8x128xf32>
    %101 = arith.select %99, %100, %95 : vector<8x128xi1>, vector<8x128xf32>
    %102 = arith.select %99, %98, %96 : vector<8x128xi1>, vector<8x128xf32>
    %c0_77 = arith.constant 0 : index
    %c24 = arith.constant 24 : index
    %c0_78 = arith.constant 0 : index
    %c0_79 = arith.constant 0 : index
    %103 = vector.load %arg1[%c0_77, %c24, %c0_78, %c0_79] : memref<2x30x8x128xf32, #tpu.memory_space<vmem>>, vector<1x1x8x128xf32>
    %104 = vector.shape_cast %103 : vector<1x1x8x128xf32> to vector<8x128xf32>
    %105 = arith.cmpf ogt, %104, %102 : vector<8x128xf32>
    %cst_80 = arith.constant 1.400000e+01 : f32
    %106 = vector.broadcast %cst_80 : f32 to vector<8x128xf32>
    %107 = arith.select %105, %106, %101 : vector<8x128xi1>, vector<8x128xf32>
    %108 = arith.select %105, %104, %102 : vector<8x128xi1>, vector<8x128xf32>
    %c0_81 = arith.constant 0 : index
    %c25 = arith.constant 25 : index
    %c0_82 = arith.constant 0 : index
    %c0_83 = arith.constant 0 : index
    %109 = vector.load %arg1[%c0_81, %c25, %c0_82, %c0_83] : memref<2x30x8x128xf32, #tpu.memory_space<vmem>>, vector<1x1x8x128xf32>
    %110 = vector.shape_cast %109 : vector<1x1x8x128xf32> to vector<8x128xf32>
    %111 = arith.cmpf ogt, %110, %108 : vector<8x128xf32>
    %cst_84 = arith.constant 1.500000e+01 : f32
    %112 = vector.broadcast %cst_84 : f32 to vector<8x128xf32>
    %113 = arith.select %111, %112, %107 : vector<8x128xi1>, vector<8x128xf32>
    %114 = arith.select %111, %110, %108 : vector<8x128xi1>, vector<8x128xf32>
    %c0_85 = arith.constant 0 : index
    %c26 = arith.constant 26 : index
    %c0_86 = arith.constant 0 : index
    %c0_87 = arith.constant 0 : index
    %115 = vector.load %arg1[%c0_85, %c26, %c0_86, %c0_87] : memref<2x30x8x128xf32, #tpu.memory_space<vmem>>, vector<1x1x8x128xf32>
    %116 = vector.shape_cast %115 : vector<1x1x8x128xf32> to vector<8x128xf32>
    %117 = arith.cmpf ogt, %116, %114 : vector<8x128xf32>
    %cst_88 = arith.constant 1.600000e+01 : f32
    %118 = vector.broadcast %cst_88 : f32 to vector<8x128xf32>
    %119 = arith.select %117, %118, %113 : vector<8x128xi1>, vector<8x128xf32>
    %120 = arith.select %117, %116, %114 : vector<8x128xi1>, vector<8x128xf32>
    %c0_89 = arith.constant 0 : index
    %c27 = arith.constant 27 : index
    %c0_90 = arith.constant 0 : index
    %c0_91 = arith.constant 0 : index
    %121 = vector.load %arg1[%c0_89, %c27, %c0_90, %c0_91] : memref<2x30x8x128xf32, #tpu.memory_space<vmem>>, vector<1x1x8x128xf32>
    %122 = vector.shape_cast %121 : vector<1x1x8x128xf32> to vector<8x128xf32>
    %123 = arith.cmpf ogt, %122, %120 : vector<8x128xf32>
    %cst_92 = arith.constant 1.700000e+01 : f32
    %124 = vector.broadcast %cst_92 : f32 to vector<8x128xf32>
    %125 = arith.select %123, %124, %119 : vector<8x128xi1>, vector<8x128xf32>
    %126 = arith.select %123, %122, %120 : vector<8x128xi1>, vector<8x128xf32>
    %c0_93 = arith.constant 0 : index
    %c28 = arith.constant 28 : index
    %c0_94 = arith.constant 0 : index
    %c0_95 = arith.constant 0 : index
    %127 = vector.load %arg1[%c0_93, %c28, %c0_94, %c0_95] : memref<2x30x8x128xf32, #tpu.memory_space<vmem>>, vector<1x1x8x128xf32>
    %128 = vector.shape_cast %127 : vector<1x1x8x128xf32> to vector<8x128xf32>
    %129 = arith.cmpf ogt, %128, %126 : vector<8x128xf32>
    %cst_96 = arith.constant 1.800000e+01 : f32
    %130 = vector.broadcast %cst_96 : f32 to vector<8x128xf32>
    %131 = arith.select %129, %130, %125 : vector<8x128xi1>, vector<8x128xf32>
    %132 = arith.select %129, %128, %126 : vector<8x128xi1>, vector<8x128xf32>
    %c0_97 = arith.constant 0 : index
    %c29 = arith.constant 29 : index
    %c0_98 = arith.constant 0 : index
    %c0_99 = arith.constant 0 : index
    %133 = vector.load %arg1[%c0_97, %c29, %c0_98, %c0_99] : memref<2x30x8x128xf32, #tpu.memory_space<vmem>>, vector<1x1x8x128xf32>
    %134 = vector.shape_cast %133 : vector<1x1x8x128xf32> to vector<8x128xf32>
    %135 = arith.cmpf ogt, %134, %132 : vector<8x128xf32>
    %cst_100 = arith.constant 1.900000e+01 : f32
    %136 = vector.broadcast %cst_100 : f32 to vector<8x128xf32>
    %137 = arith.select %135, %136, %131 : vector<8x128xi1>, vector<8x128xf32>
    %c0_101 = arith.constant 0 : index
    %c0_102 = arith.constant 0 : index
    %c0_103 = arith.constant 0 : index
    %c0_104 = arith.constant 0 : index
    %138 = vector.load %arg3[%c0_101, %c0_102, %c0_103, %c0_104] : memref<2x6x8x128xf32, #tpu.memory_space<vmem>>, vector<1x1x8x128xf32>
    %139 = vector.shape_cast %138 : vector<1x1x8x128xf32> to vector<8x128xf32>
    %140 = vector.shape_cast %137 : vector<8x128xf32> to vector<1x1x8x128xf32>
    tpu.vector_store %arg3[%c0_101, %c0_102, %c0_103, %c0_104], %140 {strides = array<i32>} : memref<2x6x8x128xf32, #tpu.memory_space<vmem>>, vector<1x1x8x128xf32>,
    %c0_105 = arith.constant 0 : index
    %c4 = arith.constant 4 : index
    %c0_106 = arith.constant 0 : index
    %c0_107 = arith.constant 0 : index
    %141 = vector.load %arg1[%c0_105, %c4, %c0_106, %c0_107] : memref<2x30x8x128xf32, #tpu.memory_space<vmem>>, vector<1x1x8x128xf32>
    %142 = vector.shape_cast %141 : vector<1x1x8x128xf32> to vector<8x128xf32>
    %c0_108 = arith.constant 0 : index
    %c1_109 = arith.constant 1 : index
    %c0_110 = arith.constant 0 : index
    %c0_111 = arith.constant 0 : index
    %143 = vector.load %arg3[%c0_108, %c1_109, %c0_110, %c0_111] : memref<2x6x8x128xf32, #tpu.memory_space<vmem>>, vector<1x1x8x128xf32>
    %144 = vector.shape_cast %143 : vector<1x1x8x128xf32> to vector<8x128xf32>
    %145 = vector.shape_cast %142 : vector<8x128xf32> to vector<1x1x8x128xf32>
    tpu.vector_store %arg3[%c0_108, %c1_109, %c0_110, %c0_111], %145 {strides = array<i32>} : memref<2x6x8x128xf32, #tpu.memory_space<vmem>>, vector<1x1x8x128xf32>,
    %146 = arith.subf %8, %17 : vector<8x128xf32>
    %c0_112 = arith.constant 0 : index
    %c2_113 = arith.constant 2 : index
    %c0_114 = arith.constant 0 : index
    %c0_115 = arith.constant 0 : index
    %147 = vector.load %arg3[%c0_112, %c2_113, %c0_114, %c0_115] : memref<2x6x8x128xf32, #tpu.memory_space<vmem>>, vector<1x1x8x128xf32>
    %148 = vector.shape_cast %147 : vector<1x1x8x128xf32> to vector<8x128xf32>
    %149 = vector.shape_cast %146 : vector<8x128xf32> to vector<1x1x8x128xf32>
    tpu.vector_store %arg3[%c0_112, %c2_113, %c0_114, %c0_115], %149 {strides = array<i32>} : memref<2x6x8x128xf32, #tpu.memory_space<vmem>>, vector<1x1x8x128xf32>,
    %150 = arith.subf %13, %21 : vector<8x128xf32>
    %c0_116 = arith.constant 0 : index
    %c3_117 = arith.constant 3 : index
    %c0_118 = arith.constant 0 : index
    %c0_119 = arith.constant 0 : index
    %151 = vector.load %arg3[%c0_116, %c3_117, %c0_118, %c0_119] : memref<2x6x8x128xf32, #tpu.memory_space<vmem>>, vector<1x1x8x128xf32>
    %152 = vector.shape_cast %151 : vector<1x1x8x128xf32> to vector<8x128xf32>
    %153 = vector.shape_cast %150 : vector<8x128xf32> to vector<1x1x8x128xf32>
    tpu.vector_store %arg3[%c0_116, %c3_117, %c0_118, %c0_119], %153 {strides = array<i32>} : memref<2x6x8x128xf32, #tpu.memory_space<vmem>>, vector<1x1x8x128xf32>,
    %154 = arith.addf %8, %17 : vector<8x128xf32>
    %c0_120 = arith.constant 0 : index
    %c4_121 = arith.constant 4 : index
    %c0_122 = arith.constant 0 : index
    %c0_123 = arith.constant 0 : index
    %155 = vector.load %arg3[%c0_120, %c4_121, %c0_122, %c0_123] : memref<2x6x8x128xf32, #tpu.memory_space<vmem>>, vector<1x1x8x128xf32>
    %156 = vector.shape_cast %155 : vector<1x1x8x128xf32> to vector<8x128xf32>
    %157 = vector.shape_cast %154 : vector<8x128xf32> to vector<1x1x8x128xf32>
    tpu.vector_store %arg3[%c0_120, %c4_121, %c0_122, %c0_123], %157 {strides = array<i32>} : memref<2x6x8x128xf32, #tpu.memory_space<vmem>>, vector<1x1x8x128xf32>,
    %158 = arith.addf %13, %21 : vector<8x128xf32>
    %c0_124 = arith.constant 0 : index
    %c5 = arith.constant 5 : index
    %c0_125 = arith.constant 0 : index
    %c0_126 = arith.constant 0 : index
    %159 = vector.load %arg3[%c0_124, %c5, %c0_125, %c0_126] : memref<2x6x8x128xf32, #tpu.memory_space<vmem>>, vector<1x1x8x128xf32>
    %160 = vector.shape_cast %159 : vector<1x1x8x128xf32> to vector<8x128xf32>
    %161 = vector.shape_cast %158 : vector<8x128xf32> to vector<1x1x8x128xf32>
    tpu.vector_store %arg3[%c0_124, %c5, %c0_125, %c0_126], %161 {strides = array<i32>} : memref<2x6x8x128xf32, #tpu.memory_space<vmem>>, vector<1x1x8x128xf32>,
    %c1_127 = arith.constant 1 : index
    %c4_128 = arith.constant 4 : index
    %c0_129 = arith.constant 0 : index
    %c0_130 = arith.constant 0 : index
    %162 = vector.load %arg1[%c1_127, %c4_128, %c0_129, %c0_130] : memref<2x30x8x128xf32, #tpu.memory_space<vmem>>, vector<1x1x8x128xf32>
    %163 = vector.shape_cast %162 : vector<1x1x8x128xf32> to vector<8x128xf32>
    %c1_131 = arith.constant 1 : index
    %c0_132 = arith.constant 0 : index
    %c0_133 = arith.constant 0 : index
    %c0_134 = arith.constant 0 : index
    %164 = vector.load %arg1[%c1_131, %c0_132, %c0_133, %c0_134] : memref<2x30x8x128xf32, #tpu.memory_space<vmem>>, vector<1x1x8x128xf32>
    %165 = vector.shape_cast %164 : vector<1x1x8x128xf32> to vector<8x128xf32>
    %c1_135 = arith.constant 1 : index
    %c1_136 = arith.constant 1 : index
    %c0_137 = arith.constant 0 : index
    %c0_138 = arith.constant 0 : index
    %166 = vector.load %arg1[%c1_135, %c1_136, %c0_137, %c0_138] : memref<2x30x8x128xf32, #tpu.memory_space<vmem>>, vector<1x1x8x128xf32>
    %167 = vector.shape_cast %166 : vector<1x1x8x128xf32> to vector<8x128xf32>
    %c1_139 = arith.constant 1 : index
    %c2_140 = arith.constant 2 : index
    %c0_141 = arith.constant 0 : index
    %c0_142 = arith.constant 0 : index
    %168 = vector.load %arg1[%c1_139, %c2_140, %c0_141, %c0_142] : memref<2x30x8x128xf32, #tpu.memory_space<vmem>>, vector<1x1x8x128xf32>
    %169 = vector.shape_cast %168 : vector<1x1x8x128xf32> to vector<8x128xf32>
    %c1_143 = arith.constant 1 : index
    %c3_144 = arith.constant 3 : index
    %c0_145 = arith.constant 0 : index
    %c0_146 = arith.constant 0 : index
    %170 = vector.load %arg1[%c1_143, %c3_144, %c0_145, %c0_146] : memref<2x30x8x128xf32, #tpu.memory_space<vmem>>, vector<1x1x8x128xf32>
    %171 = vector.shape_cast %170 : vector<1x1x8x128xf32> to vector<8x128xf32>
    %c1_147 = arith.constant 1 : index
    %c9 = arith.constant 9 : index
    %c0_148 = arith.constant 0 : index
    %c0_149 = arith.constant 0 : index
    %172 = vector.load %arg1[%c1_147, %c9, %c0_148, %c0_149] : memref<2x30x8x128xf32, #tpu.memory_space<vmem>>, vector<1x1x8x128xf32>
    %173 = vector.shape_cast %172 : vector<1x1x8x128xf32> to vector<8x128xf32>
    %174 = arith.cmpf ogt, %173, %163 : vector<8x128xf32>
    %c1_150 = arith.constant 1 : index
    %c5_151 = arith.constant 5 : index
    %c0_152 = arith.constant 0 : index
    %c0_153 = arith.constant 0 : index
    %175 = vector.load %arg1[%c1_150, %c5_151, %c0_152, %c0_153] : memref<2x30x8x128xf32, #tpu.memory_space<vmem>>, vector<1x1x8x128xf32>
    %176 = vector.shape_cast %175 : vector<1x1x8x128xf32> to vector<8x128xf32>
    %177 = arith.select %174, %176, %165 : vector<8x128xi1>, vector<8x128xf32>
    %c1_154 = arith.constant 1 : index
    %c6 = arith.constant 6 : index
    %c0_155 = arith.constant 0 : index
    %c0_156 = arith.constant 0 : index
    %178 = vector.load %arg1[%c1_154, %c6, %c0_155, %c0_156] : memref<2x30x8x128xf32, #tpu.memory_space<vmem>>, vector<1x1x8x128xf32>
    %179 = vector.shape_cast %178 : vector<1x1x8x128xf32> to vector<8x128xf32>
    %180 = arith.select %174, %179, %167 : vector<8x128xi1>, vector<8x128xf32>
    %c1_157 = arith.constant 1 : index
    %c7 = arith.constant 7 : index
    %c0_158 = arith.constant 0 : index
    %c0_159 = arith.constant 0 : index
    %181 = vector.load %arg1[%c1_157, %c7, %c0_158, %c0_159] : memref<2x30x8x128xf32, #tpu.memory_space<vmem>>, vector<1x1x8x128xf32>
    %182 = vector.shape_cast %181 : vector<1x1x8x128xf32> to vector<8x128xf32>
    %183 = arith.select %174, %182, %169 : vector<8x128xi1>, vector<8x128xf32>
    %c1_160 = arith.constant 1 : index
    %c8 = arith.constant 8 : index
    %c0_161 = arith.constant 0 : index
    %c0_162 = arith.constant 0 : index
    %184 = vector.load %arg1[%c1_160, %c8, %c0_161, %c0_162] : memref<2x30x8x128xf32, #tpu.memory_space<vmem>>, vector<1x1x8x128xf32>
    %185 = vector.shape_cast %184 : vector<1x1x8x128xf32> to vector<8x128xf32>
    %186 = arith.select %174, %185, %171 : vector<8x128xi1>, vector<8x128xf32>
    %187 = arith.select %174, %173, %163 : vector<8x128xi1>, vector<8x128xf32>
    %c1_163 = arith.constant 1 : index
    %c10_164 = arith.constant 10 : index
    %c0_165 = arith.constant 0 : index
    %c0_166 = arith.constant 0 : index
    %188 = vector.load %arg1[%c1_163, %c10_164, %c0_165, %c0_166] : memref<2x30x8x128xf32, #tpu.memory_space<vmem>>, vector<1x1x8x128xf32>
    %189 = vector.shape_cast %188 : vector<1x1x8x128xf32> to vector<8x128xf32>
    %cst_167 = arith.constant 0.000000e+00 : f32
    %190 = vector.broadcast %cst_167 : f32 to vector<8x128xf32>
    %c1_168 = arith.constant 1 : index
    %c11_169 = arith.constant 11 : index
    %c0_170 = arith.constant 0 : index
    %c0_171 = arith.constant 0 : index
    %191 = vector.load %arg1[%c1_168, %c11_169, %c0_170, %c0_171] : memref<2x30x8x128xf32, #tpu.memory_space<vmem>>, vector<1x1x8x128xf32>
    %192 = vector.shape_cast %191 : vector<1x1x8x128xf32> to vector<8x128xf32>
    %193 = arith.cmpf ogt, %192, %189 : vector<8x128xf32>
    %cst_172 = arith.constant 1.000000e+00 : f32
    %194 = vector.broadcast %cst_172 : f32 to vector<8x128xf32>
    %195 = arith.select %193, %194, %190 : vector<8x128xi1>, vector<8x128xf32>
    %196 = arith.select %193, %192, %189 : vector<8x128xi1>, vector<8x128xf32>
    %c1_173 = arith.constant 1 : index
    %c12_174 = arith.constant 12 : index
    %c0_175 = arith.constant 0 : index
    %c0_176 = arith.constant 0 : index
    %197 = vector.load %arg1[%c1_173, %c12_174, %c0_175, %c0_176] : memref<2x30x8x128xf32, #tpu.memory_space<vmem>>, vector<1x1x8x128xf32>
    %198 = vector.shape_cast %197 : vector<1x1x8x128xf32> to vector<8x128xf32>
    %199 = arith.cmpf ogt, %198, %196 : vector<8x128xf32>
    %cst_177 = arith.constant 2.000000e+00 : f32
    %200 = vector.broadcast %cst_177 : f32 to vector<8x128xf32>
    %201 = arith.select %199, %200, %195 : vector<8x128xi1>, vector<8x128xf32>
    %202 = arith.select %199, %198, %196 : vector<8x128xi1>, vector<8x128xf32>
    %c1_178 = arith.constant 1 : index
    %c13_179 = arith.constant 13 : index
    %c0_180 = arith.constant 0 : index
    %c0_181 = arith.constant 0 : index
    %203 = vector.load %arg1[%c1_178, %c13_179, %c0_180, %c0_181] : memref<2x30x8x128xf32, #tpu.memory_space<vmem>>, vector<1x1x8x128xf32>
    %204 = vector.shape_cast %203 : vector<1x1x8x128xf32> to vector<8x128xf32>
    %205 = arith.cmpf ogt, %204, %202 : vector<8x128xf32>
    %cst_182 = arith.constant 3.000000e+00 : f32
    %206 = vector.broadcast %cst_182 : f32 to vector<8x128xf32>
    %207 = arith.select %205, %206, %201 : vector<8x128xi1>, vector<8x128xf32>
    %208 = arith.select %205, %204, %202 : vector<8x128xi1>, vector<8x128xf32>
    %c1_183 = arith.constant 1 : index
    %c14_184 = arith.constant 14 : index
    %c0_185 = arith.constant 0 : index
    %c0_186 = arith.constant 0 : index
    %209 = vector.load %arg1[%c1_183, %c14_184, %c0_185, %c0_186] : memref<2x30x8x128xf32, #tpu.memory_space<vmem>>, vector<1x1x8x128xf32>
    %210 = vector.shape_cast %209 : vector<1x1x8x128xf32> to vector<8x128xf32>
    %211 = arith.cmpf ogt, %210, %208 : vector<8x128xf32>
    %cst_187 = arith.constant 4.000000e+00 : f32
    %212 = vector.broadcast %cst_187 : f32 to vector<8x128xf32>
    %213 = arith.select %211, %212, %207 : vector<8x128xi1>, vector<8x128xf32>
    %214 = arith.select %211, %210, %208 : vector<8x128xi1>, vector<8x128xf32>
    %c1_188 = arith.constant 1 : index
    %c15_189 = arith.constant 15 : index
    %c0_190 = arith.constant 0 : index
    %c0_191 = arith.constant 0 : index
    %215 = vector.load %arg1[%c1_188, %c15_189, %c0_190, %c0_191] : memref<2x30x8x128xf32, #tpu.memory_space<vmem>>, vector<1x1x8x128xf32>
    %216 = vector.shape_cast %215 : vector<1x1x8x128xf32> to vector<8x128xf32>
    %217 = arith.cmpf ogt, %216, %214 : vector<8x128xf32>
    %cst_192 = arith.constant 5.000000e+00 : f32
    %218 = vector.broadcast %cst_192 : f32 to vector<8x128xf32>
    %219 = arith.select %217, %218, %213 : vector<8x128xi1>, vector<8x128xf32>
    %220 = arith.select %217, %216, %214 : vector<8x128xi1>, vector<8x128xf32>
    %c1_193 = arith.constant 1 : index
    %c16_194 = arith.constant 16 : index
    %c0_195 = arith.constant 0 : index
    %c0_196 = arith.constant 0 : index
    %221 = vector.load %arg1[%c1_193, %c16_194, %c0_195, %c0_196] : memref<2x30x8x128xf32, #tpu.memory_space<vmem>>, vector<1x1x8x128xf32>
    %222 = vector.shape_cast %221 : vector<1x1x8x128xf32> to vector<8x128xf32>
    %223 = arith.cmpf ogt, %222, %220 : vector<8x128xf32>
    %cst_197 = arith.constant 6.000000e+00 : f32
    %224 = vector.broadcast %cst_197 : f32 to vector<8x128xf32>
    %225 = arith.select %223, %224, %219 : vector<8x128xi1>, vector<8x128xf32>
    %226 = arith.select %223, %222, %220 : vector<8x128xi1>, vector<8x128xf32>
    %c1_198 = arith.constant 1 : index
    %c17_199 = arith.constant 17 : index
    %c0_200 = arith.constant 0 : index
    %c0_201 = arith.constant 0 : index
    %227 = vector.load %arg1[%c1_198, %c17_199, %c0_200, %c0_201] : memref<2x30x8x128xf32, #tpu.memory_space<vmem>>, vector<1x1x8x128xf32>
    %228 = vector.shape_cast %227 : vector<1x1x8x128xf32> to vector<8x128xf32>
    %229 = arith.cmpf ogt, %228, %226 : vector<8x128xf32>
    %cst_202 = arith.constant 7.000000e+00 : f32
    %230 = vector.broadcast %cst_202 : f32 to vector<8x128xf32>
    %231 = arith.select %229, %230, %225 : vector<8x128xi1>, vector<8x128xf32>
    %232 = arith.select %229, %228, %226 : vector<8x128xi1>, vector<8x128xf32>
    %c1_203 = arith.constant 1 : index
    %c18_204 = arith.constant 18 : index
    %c0_205 = arith.constant 0 : index
    %c0_206 = arith.constant 0 : index
    %233 = vector.load %arg1[%c1_203, %c18_204, %c0_205, %c0_206] : memref<2x30x8x128xf32, #tpu.memory_space<vmem>>, vector<1x1x8x128xf32>
    %234 = vector.shape_cast %233 : vector<1x1x8x128xf32> to vector<8x128xf32>
    %235 = arith.cmpf ogt, %234, %232 : vector<8x128xf32>
    %cst_207 = arith.constant 8.000000e+00 : f32
    %236 = vector.broadcast %cst_207 : f32 to vector<8x128xf32>
    %237 = arith.select %235, %236, %231 : vector<8x128xi1>, vector<8x128xf32>
    %238 = arith.select %235, %234, %232 : vector<8x128xi1>, vector<8x128xf32>
    %c1_208 = arith.constant 1 : index
    %c19_209 = arith.constant 19 : index
    %c0_210 = arith.constant 0 : index
    %c0_211 = arith.constant 0 : index
    %239 = vector.load %arg1[%c1_208, %c19_209, %c0_210, %c0_211] : memref<2x30x8x128xf32, #tpu.memory_space<vmem>>, vector<1x1x8x128xf32>
    %240 = vector.shape_cast %239 : vector<1x1x8x128xf32> to vector<8x128xf32>
    %241 = arith.cmpf ogt, %240, %238 : vector<8x128xf32>
    %cst_212 = arith.constant 9.000000e+00 : f32
    %242 = vector.broadcast %cst_212 : f32 to vector<8x128xf32>
    %243 = arith.select %241, %242, %237 : vector<8x128xi1>, vector<8x128xf32>
    %244 = arith.select %241, %240, %238 : vector<8x128xi1>, vector<8x128xf32>
    %c1_213 = arith.constant 1 : index
    %c20_214 = arith.constant 20 : index
    %c0_215 = arith.constant 0 : index
    %c0_216 = arith.constant 0 : index
    %245 = vector.load %arg1[%c1_213, %c20_214, %c0_215, %c0_216] : memref<2x30x8x128xf32, #tpu.memory_space<vmem>>, vector<1x1x8x128xf32>
    %246 = vector.shape_cast %245 : vector<1x1x8x128xf32> to vector<8x128xf32>
    %247 = arith.cmpf ogt, %246, %244 : vector<8x128xf32>
    %cst_217 = arith.constant 1.000000e+01 : f32
    %248 = vector.broadcast %cst_217 : f32 to vector<8x128xf32>
    %249 = arith.select %247, %248, %243 : vector<8x128xi1>, vector<8x128xf32>
    %250 = arith.select %247, %246, %244 : vector<8x128xi1>, vector<8x128xf32>
    %c1_218 = arith.constant 1 : index
    %c21_219 = arith.constant 21 : index
    %c0_220 = arith.constant 0 : index
    %c0_221 = arith.constant 0 : index
    %251 = vector.load %arg1[%c1_218, %c21_219, %c0_220, %c0_221] : memref<2x30x8x128xf32, #tpu.memory_space<vmem>>, vector<1x1x8x128xf32>
    %252 = vector.shape_cast %251 : vector<1x1x8x128xf32> to vector<8x128xf32>
    %253 = arith.cmpf ogt, %252, %250 : vector<8x128xf32>
    %cst_222 = arith.constant 1.100000e+01 : f32
    %254 = vector.broadcast %cst_222 : f32 to vector<8x128xf32>
    %255 = arith.select %253, %254, %249 : vector<8x128xi1>, vector<8x128xf32>
    %256 = arith.select %253, %252, %250 : vector<8x128xi1>, vector<8x128xf32>
    %c1_223 = arith.constant 1 : index
    %c22_224 = arith.constant 22 : index
    %c0_225 = arith.constant 0 : index
    %c0_226 = arith.constant 0 : index
    %257 = vector.load %arg1[%c1_223, %c22_224, %c0_225, %c0_226] : memref<2x30x8x128xf32, #tpu.memory_space<vmem>>, vector<1x1x8x128xf32>
    %258 = vector.shape_cast %257 : vector<1x1x8x128xf32> to vector<8x128xf32>
    %259 = arith.cmpf ogt, %258, %256 : vector<8x128xf32>
    %cst_227 = arith.constant 1.200000e+01 : f32
    %260 = vector.broadcast %cst_227 : f32 to vector<8x128xf32>
    %261 = arith.select %259, %260, %255 : vector<8x128xi1>, vector<8x128xf32>
    %262 = arith.select %259, %258, %256 : vector<8x128xi1>, vector<8x128xf32>
    %c1_228 = arith.constant 1 : index
    %c23_229 = arith.constant 23 : index
    %c0_230 = arith.constant 0 : index
    %c0_231 = arith.constant 0 : index
    %263 = vector.load %arg1[%c1_228, %c23_229, %c0_230, %c0_231] : memref<2x30x8x128xf32, #tpu.memory_space<vmem>>, vector<1x1x8x128xf32>
    %264 = vector.shape_cast %263 : vector<1x1x8x128xf32> to vector<8x128xf32>
    %265 = arith.cmpf ogt, %264, %262 : vector<8x128xf32>
    %cst_232 = arith.constant 1.300000e+01 : f32
    %266 = vector.broadcast %cst_232 : f32 to vector<8x128xf32>
    %267 = arith.select %265, %266, %261 : vector<8x128xi1>, vector<8x128xf32>
    %268 = arith.select %265, %264, %262 : vector<8x128xi1>, vector<8x128xf32>
    %c1_233 = arith.constant 1 : index
    %c24_234 = arith.constant 24 : index
    %c0_235 = arith.constant 0 : index
    %c0_236 = arith.constant 0 : index
    %269 = vector.load %arg1[%c1_233, %c24_234, %c0_235, %c0_236] : memref<2x30x8x128xf32, #tpu.memory_space<vmem>>, vector<1x1x8x128xf32>
    %270 = vector.shape_cast %269 : vector<1x1x8x128xf32> to vector<8x128xf32>
    %271 = arith.cmpf ogt, %270, %268 : vector<8x128xf32>
    %cst_237 = arith.constant 1.400000e+01 : f32
    %272 = vector.broadcast %cst_237 : f32 to vector<8x128xf32>
    %273 = arith.select %271, %272, %267 : vector<8x128xi1>, vector<8x128xf32>
    %274 = arith.select %271, %270, %268 : vector<8x128xi1>, vector<8x128xf32>
    %c1_238 = arith.constant 1 : index
    %c25_239 = arith.constant 25 : index
    %c0_240 = arith.constant 0 : index
    %c0_241 = arith.constant 0 : index
    %275 = vector.load %arg1[%c1_238, %c25_239, %c0_240, %c0_241] : memref<2x30x8x128xf32, #tpu.memory_space<vmem>>, vector<1x1x8x128xf32>
    %276 = vector.shape_cast %275 : vector<1x1x8x128xf32> to vector<8x128xf32>
    %277 = arith.cmpf ogt, %276, %274 : vector<8x128xf32>
    %cst_242 = arith.constant 1.500000e+01 : f32
    %278 = vector.broadcast %cst_242 : f32 to vector<8x128xf32>
    %279 = arith.select %277, %278, %273 : vector<8x128xi1>, vector<8x128xf32>
    %280 = arith.select %277, %276, %274 : vector<8x128xi1>, vector<8x128xf32>
    %c1_243 = arith.constant 1 : index
    %c26_244 = arith.constant 26 : index
    %c0_245 = arith.constant 0 : index
    %c0_246 = arith.constant 0 : index
    %281 = vector.load %arg1[%c1_243, %c26_244, %c0_245, %c0_246] : memref<2x30x8x128xf32, #tpu.memory_space<vmem>>, vector<1x1x8x128xf32>
    %282 = vector.shape_cast %281 : vector<1x1x8x128xf32> to vector<8x128xf32>
    %283 = arith.cmpf ogt, %282, %280 : vector<8x128xf32>
    %cst_247 = arith.constant 1.600000e+01 : f32
    %284 = vector.broadcast %cst_247 : f32 to vector<8x128xf32>
    %285 = arith.select %283, %284, %279 : vector<8x128xi1>, vector<8x128xf32>
    %286 = arith.select %283, %282, %280 : vector<8x128xi1>, vector<8x128xf32>
    %c1_248 = arith.constant 1 : index
    %c27_249 = arith.constant 27 : index
    %c0_250 = arith.constant 0 : index
    %c0_251 = arith.constant 0 : index
    %287 = vector.load %arg1[%c1_248, %c27_249, %c0_250, %c0_251] : memref<2x30x8x128xf32, #tpu.memory_space<vmem>>, vector<1x1x8x128xf32>
    %288 = vector.shape_cast %287 : vector<1x1x8x128xf32> to vector<8x128xf32>
    %289 = arith.cmpf ogt, %288, %286 : vector<8x128xf32>
    %cst_252 = arith.constant 1.700000e+01 : f32
    %290 = vector.broadcast %cst_252 : f32 to vector<8x128xf32>
    %291 = arith.select %289, %290, %285 : vector<8x128xi1>, vector<8x128xf32>
    %292 = arith.select %289, %288, %286 : vector<8x128xi1>, vector<8x128xf32>
    %c1_253 = arith.constant 1 : index
    %c28_254 = arith.constant 28 : index
    %c0_255 = arith.constant 0 : index
    %c0_256 = arith.constant 0 : index
    %293 = vector.load %arg1[%c1_253, %c28_254, %c0_255, %c0_256] : memref<2x30x8x128xf32, #tpu.memory_space<vmem>>, vector<1x1x8x128xf32>
    %294 = vector.shape_cast %293 : vector<1x1x8x128xf32> to vector<8x128xf32>
    %295 = arith.cmpf ogt, %294, %292 : vector<8x128xf32>
    %cst_257 = arith.constant 1.800000e+01 : f32
    %296 = vector.broadcast %cst_257 : f32 to vector<8x128xf32>
    %297 = arith.select %295, %296, %291 : vector<8x128xi1>, vector<8x128xf32>
    %298 = arith.select %295, %294, %292 : vector<8x128xi1>, vector<8x128xf32>
    %c1_258 = arith.constant 1 : index
    %c29_259 = arith.constant 29 : index
    %c0_260 = arith.constant 0 : index
    %c0_261 = arith.constant 0 : index
    %299 = vector.load %arg1[%c1_258, %c29_259, %c0_260, %c0_261] : memref<2x30x8x128xf32, #tpu.memory_space<vmem>>, vector<1x1x8x128xf32>
    %300 = vector.shape_cast %299 : vector<1x1x8x128xf32> to vector<8x128xf32>
    %301 = arith.cmpf ogt, %300, %298 : vector<8x128xf32>
    %cst_262 = arith.constant 1.900000e+01 : f32
    %302 = vector.broadcast %cst_262 : f32 to vector<8x128xf32>
    %303 = arith.select %301, %302, %297 : vector<8x128xi1>, vector<8x128xf32>
    %304 = arith.negf %187 : vector<8x128xf32>
    %305 = math.exp %304 : vector<8x128xf32>
    %cst_263 = arith.constant 1.000000e+00 : f32
    %306 = vector.broadcast %cst_263 : f32 to vector<8x128xf32>
    %307 = arith.addf %306, %305 : vector<8x128xf32>
    %308 = arith.divf %306, %307 : vector<8x128xf32>
    %309 = arith.negf %177 : vector<8x128xf32>
    %310 = math.exp %309 : vector<8x128xf32>
    %cst_264 = arith.constant 1.000000e+00 : f32
    %311 = vector.broadcast %cst_264 : f32 to vector<8x128xf32>
    %312 = arith.addf %311, %310 : vector<8x128xf32>
    %313 = arith.divf %311, %312 : vector<8x128xf32>
    %314 = arith.negf %180 : vector<8x128xf32>
    %315 = math.exp %314 : vector<8x128xf32>
    %cst_265 = arith.constant 1.000000e+00 : f32
    %316 = vector.broadcast %cst_265 : f32 to vector<8x128xf32>
    %317 = arith.addf %316, %315 : vector<8x128xf32>
    %318 = arith.divf %316, %317 : vector<8x128xf32>
    %319 = arith.negf %183 : vector<8x128xf32>
    %320 = math.exp %319 : vector<8x128xf32>
    %cst_266 = arith.constant 1.000000e+00 : f32
    %321 = vector.broadcast %cst_266 : f32 to vector<8x128xf32>
    %322 = arith.addf %321, %320 : vector<8x128xf32>
    %323 = arith.divf %321, %322 : vector<8x128xf32>
    %324 = arith.negf %186 : vector<8x128xf32>
    %325 = math.exp %324 : vector<8x128xf32>
    %cst_267 = arith.constant 1.000000e+00 : f32
    %326 = vector.broadcast %cst_267 : f32 to vector<8x128xf32>
    %327 = arith.addf %326, %325 : vector<8x128xf32>
    %328 = arith.divf %326, %327 : vector<8x128xf32>
    %329 = arith.addf %313, %3 : vector<8x128xf32>
    %cst_268 = arith.constant 6.400000e+01 : f32
    %330 = vector.broadcast %cst_268 : f32 to vector<8x128xf32>
    %331 = arith.mulf %329, %330 : vector<8x128xf32>
    %332 = arith.addf %318, %1 : vector<8x128xf32>
    %cst_269 = arith.constant 6.400000e+01 : f32
    %333 = vector.broadcast %cst_269 : f32 to vector<8x128xf32>
    %334 = arith.mulf %332, %333 : vector<8x128xf32>
    %cst_270 = arith.constant 2.240000e+02 : f32
    %335 = vector.broadcast %cst_270 : f32 to vector<8x128xf32>
    %336 = arith.mulf %323, %335 : vector<8x128xf32>
    %cst_271 = arith.constant 2.240000e+02 : f32
    %337 = vector.broadcast %cst_271 : f32 to vector<8x128xf32>
    %338 = arith.mulf %328, %337 : vector<8x128xf32>
    %c1_272 = arith.constant 1 : index
    %c0_273 = arith.constant 0 : index
    %c0_274 = arith.constant 0 : index
    %c0_275 = arith.constant 0 : index
    %339 = vector.load %arg3[%c1_272, %c0_273, %c0_274, %c0_275] : memref<2x6x8x128xf32, #tpu.memory_space<vmem>>, vector<1x1x8x128xf32>
    %340 = vector.shape_cast %339 : vector<1x1x8x128xf32> to vector<8x128xf32>
    %341 = vector.shape_cast %303 : vector<8x128xf32> to vector<1x1x8x128xf32>
    tpu.vector_store %arg3[%c1_272, %c0_273, %c0_274, %c0_275], %341 {strides = array<i32>} : memref<2x6x8x128xf32, #tpu.memory_space<vmem>>, vector<1x1x8x128xf32>,
    %c1_276 = arith.constant 1 : index
    %c1_277 = arith.constant 1 : index
    %c0_278 = arith.constant 0 : index
    %c0_279 = arith.constant 0 : index
    %342 = vector.load %arg3[%c1_276, %c1_277, %c0_278, %c0_279] : memref<2x6x8x128xf32, #tpu.memory_space<vmem>>, vector<1x1x8x128xf32>
    %343 = vector.shape_cast %342 : vector<1x1x8x128xf32> to vector<8x128xf32>
    %344 = vector.shape_cast %308 : vector<8x128xf32> to vector<1x1x8x128xf32>
    tpu.vector_store %arg3[%c1_276, %c1_277, %c0_278, %c0_279], %344 {strides = array<i32>} : memref<2x6x8x128xf32, #tpu.memory_space<vmem>>, vector<1x1x8x128xf32>,
    %345 = arith.subf %331, %336 : vector<8x128xf32>
    %c1_280 = arith.constant 1 : index
    %c2_281 = arith.constant 2 : index
    %c0_282 = arith.constant 0 : index
    %c0_283 = arith.constant 0 : index
    %346 = vector.load %arg3[%c1_280, %c2_281, %c0_282, %c0_283] : memref<2x6x8x128xf32, #tpu.memory_space<vmem>>, vector<1x1x8x128xf32>
    %347 = vector.shape_cast %346 : vector<1x1x8x128xf32> to vector<8x128xf32>
    %348 = vector.shape_cast %345 : vector<8x128xf32> to vector<1x1x8x128xf32>
    tpu.vector_store %arg3[%c1_280, %c2_281, %c0_282, %c0_283], %348 {strides = array<i32>} : memref<2x6x8x128xf32, #tpu.memory_space<vmem>>, vector<1x1x8x128xf32>,
    %349 = arith.subf %334, %338 : vector<8x128xf32>
    %c1_284 = arith.constant 1 : index
    %c3_285 = arith.constant 3 : index
    %c0_286 = arith.constant 0 : index
    %c0_287 = arith.constant 0 : index
    %350 = vector.load %arg3[%c1_284, %c3_285, %c0_286, %c0_287] : memref<2x6x8x128xf32, #tpu.memory_space<vmem>>, vector<1x1x8x128xf32>
    %351 = vector.shape_cast %350 : vector<1x1x8x128xf32> to vector<8x128xf32>
    %352 = vector.shape_cast %349 : vector<8x128xf32> to vector<1x1x8x128xf32>
    tpu.vector_store %arg3[%c1_284, %c3_285, %c0_286, %c0_287], %352 {strides = array<i32>} : memref<2x6x8x128xf32, #tpu.memory_space<vmem>>, vector<1x1x8x128xf32>,
    %353 = arith.addf %331, %336 : vector<8x128xf32>
    %c1_288 = arith.constant 1 : index
    %c4_289 = arith.constant 4 : index
    %c0_290 = arith.constant 0 : index
    %c0_291 = arith.constant 0 : index
    %354 = vector.load %arg3[%c1_288, %c4_289, %c0_290, %c0_291] : memref<2x6x8x128xf32, #tpu.memory_space<vmem>>, vector<1x1x8x128xf32>
    %355 = vector.shape_cast %354 : vector<1x1x8x128xf32> to vector<8x128xf32>
    %356 = vector.shape_cast %353 : vector<8x128xf32> to vector<1x1x8x128xf32>
    tpu.vector_store %arg3[%c1_288, %c4_289, %c0_290, %c0_291], %356 {strides = array<i32>} : memref<2x6x8x128xf32, #tpu.memory_space<vmem>>, vector<1x1x8x128xf32>,
    %357 = arith.addf %334, %338 : vector<8x128xf32>
    %c1_292 = arith.constant 1 : index
    %c5_293 = arith.constant 5 : index
    %c0_294 = arith.constant 0 : index
    %c0_295 = arith.constant 0 : index
    %358 = vector.load %arg3[%c1_292, %c5_293, %c0_294, %c0_295] : memref<2x6x8x128xf32, #tpu.memory_space<vmem>>, vector<1x1x8x128xf32>
    %359 = vector.shape_cast %358 : vector<1x1x8x128xf32> to vector<8x128xf32>
    %360 = vector.shape_cast %357 : vector<8x128xf32> to vector<1x1x8x128xf32>
    tpu.vector_store %arg3[%c1_292, %c5_293, %c0_294, %c0_295], %360 {strides = array<i32>} : memref<2x6x8x128xf32, #tpu.memory_space<vmem>>, vector<1x1x8x128xf32>,
    return
  }
  func.func @transform_0(%arg0: i32) -> (i32, i32, i32, i32) {
    %c0_i32 = arith.constant 0 : i32
    %c0_i32_0 = arith.constant 0 : i32
    %c0_i32_1 = arith.constant 0 : i32
    %c0_i32_2 = arith.constant 0 : i32
    return %c0_i32, %c0_i32_0, %c0_i32_1, %arg0 : i32, i32, i32, i32
  }
  func.func @transform_1(%arg0: i32) -> (i32, i32, i32) {
    %c0_i32 = arith.constant 0 : i32
    %c0_i32_0 = arith.constant 0 : i32
    %c0_i32_1 = arith.constant 0 : i32
    return %c0_i32, %c0_i32_0, %arg0 : i32, i32, i32
  }
  func.func @transform_2(%arg0: i32) -> (i32, i32, i32, i32) {
    %c0_i32 = arith.constant 0 : i32
    %c0_i32_0 = arith.constant 0 : i32
    %c0_i32_1 = arith.constant 0 : i32
    %c0_i32_2 = arith.constant 0 : i32
    return %c0_i32, %c0_i32_0, %c0_i32_1, %arg0 : i32, i32, i32, i32
  }
}

</mosaic_0001>

<llo_original>
// kernel: _decode_device.1
$region0: #{_decode_device.1}
  #allocation0 [shape = 'u32[]', space=smem, size = 0x4, offset = 0x4, fixed_abs, tag = 'smem constant byte address 0x4 - core index']
  #allocation1 [shape = 'u32[144,128]{1,0:T(1,128)}', space=vmem, size = 0x12000, scoped, tag = 'internal scratch']
  %s0 = inlined_call_operand.vmem [shape: f32[2,30,8,128], index: 0, kind: input, shape index: {}]
  %s1 = inlined_call_operand.vmem [shape: f32[2,8,128], index: 1, kind: input, shape index: {}]
  %s2 = inlined_call_operand.hbm [shape: f32[2,6,8,128], index: 2, kind: output, shape index: {}]
  %s3 = sld [smem:[#allocation0]]
  $region18: #{_decode_device.1} parent=0
    _
  %s5 = ssub.s32 1, %s3
  %s6 = scalar_select 0, %s5, %s3
  $region1: #{_decode_device.1} parent=0
    #allocation2 [shape = 'u8[49152]{0}', space=vmem, size = 0xc000, scoped, tag = 'output window, operand 0, single buffered']
    #allocation3 [shape = 's32[1]{0}', space=sflag, size = 0x4, scoped, tag = 'scoped memory for _decode_device.1']
    %7 = vsyncpa [#allocation3], 0
    // Predicated region
    $region2: #{_decode_device.1} parent=1 // pred_check
      _
    $region3: #{_decode_device.1} parent=1 // pred_check_branch
      %9 = sbr.rel (0) target = $region5
    $region4: #{_decode_device.1} parent=1 // pred_region
      _
    $region5: #{_decode_device.1} parent=1 // pred_fallthru
      _
    // Predicated region
    $region6: #{_decode_device.1} parent=1 // pred_check
      _
    $region7: #{_decode_device.1} parent=1 // pred_check_branch
      %11 = sbr.rel (0) target = $region9
    $region8: #{_decode_device.1} parent=1 // pred_region
      _
    $region9: #{_decode_device.1} parent=1 // pred_fallthru
      _
    %v12 = vld [vmem:[%s1] sm:$0xff]
    %s13 = scalar_lea.vmem %s1, 8
    %v14 = vld [vmem:[%s13] sm:$0xff]
    %v15 = vld [vmem:[%s0] sm:$0xff]
    %v16 = vadd.f32 %v15, %v14
    %v17 = vmul.f32 %v16, 64.0
    %s18 = scalar_lea.vmem %s0, 8
    %v19 = vld [vmem:[%s18] sm:$0xff]
    %v20 = vadd.f32 %v19, %v12
    %v21 = vmul.f32 %v20, 64.0
    %s22 = scalar_lea.vmem %s0, 16
    %v23 = vld [vmem:[%s22] sm:$0xff]
    %v24 = vmul.f32 %v23, 224.0
    %s25 = scalar_lea.vmem %s0, 24
    %v26 = vld [vmem:[%s25] sm:$0xff]
    %v27 = vmul.f32 %v26, 224.0
    %s28 = scalar_lea.vmem %s0, 80
    %v29 = vld [vmem:[%s28] sm:$0xff]
    %s30 = scalar_lea.vmem %s0, 88
    %v31 = vld [vmem:[%s30] sm:$0xff]
    %vm32 = vcmp.gt.f32.partialorder %v31, %v29
    %v33 = vsel %vm32, 1.0, 0.0
    %v34 = vsel %vm32, %v31, %v29
    %s35 = scalar_lea.vmem %s0, 96
    %v36 = vld [vmem:[%s35] sm:$0xff]
    %vm37 = vcmp.gt.f32.partialorder %v36, %v34
    %v38 = vsel %vm37, 2.0, %v33
    %v39 = vsel %vm37, %v36, %v34
    %s40 = scalar_lea.vmem %s0, 104
    %v41 = vld [vmem:[%s40] sm:$0xff]
    %vm42 = vcmp.gt.f32.partialorder %v41, %v39
    %v43 = vsel %vm42, 3.0, %v38
    %v44 = vsel %vm42, %v41, %v39
    %s45 = scalar_lea.vmem %s0, 112
    %v46 = vld [vmem:[%s45] sm:$0xff]
    %vm47 = vcmp.gt.f32.partialorder %v46, %v44
    %v48 = vsel %vm47, 4.0, %v43
    %v49 = vsel %vm47, %v46, %v44
    %s50 = scalar_lea.vmem %s0, 120
    %v51 = vld [vmem:[%s50] sm:$0xff]
    %vm52 = vcmp.gt.f32.partialorder %v51, %v49
    %v53 = vsel %vm52, 5.0, %v48
    %v54 = vsel %vm52, %v51, %v49
    %s55 = scalar_lea.vmem %s0, 128
    %v56 = vld [vmem:[%s55] sm:$0xff]
    %vm57 = vcmp.gt.f32.partialorder %v56, %v54
    %v58 = vsel %vm57, 6.0, %v53
    %v59 = vsel %vm57, %v56, %v54
    %s60 = scalar_lea.vmem %s0, 136
    %v61 = vld [vmem:[%s60] sm:$0xff]
    %vm62 = vcmp.gt.f32.partialorder %v61, %v59
    %v63 = vsel %vm62, 7.0, %v58
    %v64 = vsel %vm62, %v61, %v59
    %s65 = scalar_lea.vmem %s0, 144
    %v66 = vld [vmem:[%s65] sm:$0xff]
    %vm67 = vcmp.gt.f32.partialorder %v66, %v64
    %v68 = vsel %vm67, 8.0, %v63
    %v69 = vsel %vm67, %v66, %v64
    %s70 = scalar_lea.vmem %s0, 152
    %v71 = vld [vmem:[%s70] sm:$0xff]
    %vm72 = vcmp.gt.f32.partialorder %v71, %v69
    %v73 = vsel %vm72, 9.0, %v68
    %v74 = vsel %vm72, %v71, %v69
    %s75 = scalar_lea.vmem %s0, 160
    %v76 = vld [vmem:[%s75] sm:$0xff]
    %vm77 = vcmp.gt.f32.partialorder %v76, %v74
    %v78 = vsel %vm77, 10.0, %v73
    %v79 = vsel %vm77, %v76, %v74
    %s80 = scalar_lea.vmem %s0, 168
    %v81 = vld [vmem:[%s80] sm:$0xff]
    %vm82 = vcmp.gt.f32.partialorder %v81, %v79
    %v83 = vsel %vm82, 11.0, %v78
    %v84 = vsel %vm82, %v81, %v79
    %s85 = scalar_lea.vmem %s0, 176
    %v86 = vld [vmem:[%s85] sm:$0xff]
    %vm87 = vcmp.gt.f32.partialorder %v86, %v84
    %v88 = vsel %vm87, 12.0, %v83
    %v89 = vsel %vm87, %v86, %v84
    %s90 = scalar_lea.vmem %s0, 184
    %v91 = vld [vmem:[%s90] sm:$0xff]
    %vm92 = vcmp.gt.f32.partialorder %v91, %v89
    %v93 = vsel %vm92, 13.0, %v88
    %v94 = vsel %vm92, %v91, %v89
    %s95 = scalar_lea.vmem %s0, 192
    %v96 = vld [vmem:[%s95] sm:$0xff]
    %vm97 = vcmp.gt.f32.partialorder %v96, %v94
    %v98 = vsel %vm97, 14.0, %v93
    %v99 = vsel %vm97, %v96, %v94
    %s100 = scalar_lea.vmem %s0, 200
    %v101 = vld [vmem:[%s100] sm:$0xff]
    %vm102 = vcmp.gt.f32.partialorder %v101, %v99
    %v103 = vsel %vm102, 15.0, %v98
    %v104 = vsel %vm102, %v101, %v99
    %s105 = scalar_lea.vmem %s0, 208
    %v106 = vld [vmem:[%s105] sm:$0xff]
    %vm107 = vcmp.gt.f32.partialorder %v106, %v104
    %v108 = vsel %vm107, 16.0, %v103
    %v109 = vsel %vm107, %v106, %v104
    %s110 = scalar_lea.vmem %s0, 216
    %v111 = vld [vmem:[%s110] sm:$0xff]
    %vm112 = vcmp.gt.f32.partialorder %v111, %v109
    %v113 = vsel %vm112, 17.0, %v108
    %v114 = vsel %vm112, %v111, %v109
    %s115 = scalar_lea.vmem %s0, 224
    %v116 = vld [vmem:[%s115] sm:$0xff]
    %vm117 = vcmp.gt.f32.partialorder %v116, %v114
    %v118 = vsel %vm117, 18.0, %v113
    %v119 = vsel %vm117, %v116, %v114
    %s120 = scalar_lea.vmem %s0, 232
    %v121 = vld [vmem:[%s120] sm:$0xff]
    %vm122 = vcmp.gt.f32.partialorder %v121, %v119
    %v123 = vsel %vm122, 19.0, %v118
    %124 = vst [vmem:[#allocation2] sm:$0xff] %v123
    %s125 = scalar_lea.vmem %s0, 32
    %v126 = vld [vmem:[%s125] sm:$0xff]
    %s127 = scalar_lea.vmem [#allocation2], 8
    %128 = vst [vmem:[%s127] sm:$0xff] %v126
    %v129 = vsub.f32 %v17, %v24
    %s130 = scalar_lea.vmem [#allocation2], 16
    %131 = vst [vmem:[%s130] sm:$0xff] %v129
    %v132 = vsub.f32 %v21, %v27
    %s133 = scalar_lea.vmem [#allocation2], 24
    %134 = vst [vmem:[%s133] sm:$0xff] %v132
    %v135 = vadd.f32 %v17, %v24
    %s136 = scalar_lea.vmem [#allocation2], 32
    %137 = vst [vmem:[%s136] sm:$0xff] %v135
    %v138 = vadd.f32 %v21, %v27
    %s139 = scalar_lea.vmem [#allocation2], 40
    %140 = vst [vmem:[%s139] sm:$0xff] %v138
    %s141 = scalar_lea.vmem %s0, 272
    %v142 = vld [vmem:[%s141] sm:$0xff]
    %s143 = scalar_lea.vmem %s0, 240
    %v144 = vld [vmem:[%s143] sm:$0xff]
    %s145 = scalar_lea.vmem %s0, 248
    %v146 = vld [vmem:[%s145] sm:$0xff]
    %s147 = scalar_lea.vmem %s0, 256
    %v148 = vld [vmem:[%s147] sm:$0xff]
    %s149 = scalar_lea.vmem %s0, 264
    %v150 = vld [vmem:[%s149] sm:$0xff]
    %s151 = scalar_lea.vmem %s0, 312
    %v152 = vld [vmem:[%s151] sm:$0xff]
    %vm153 = vcmp.gt.f32.partialorder %v152, %v142
    %s154 = scalar_lea.vmem %s0, 280
    %v155 = vld [vmem:[%s154] sm:$0xff]
    %v156 = vsel %vm153, %v155, %v144
    %s157 = scalar_lea.vmem %s0, 288
    %v158 = vld [vmem:[%s157] sm:$0xff]
    %v159 = vsel %vm153, %v158, %v146
    %s160 = scalar_lea.vmem %s0, 296
    %v161 = vld [vmem:[%s160] sm:$0xff]
    %v162 = vsel %vm153, %v161, %v148
    %s163 = scalar_lea.vmem %s0, 304
    %v164 = vld [vmem:[%s163] sm:$0xff]
    %v165 = vsel %vm153, %v164, %v150
    %v166 = vsel %vm153, %v152, %v142
    %s167 = scalar_lea.vmem %s0, 320
    %v168 = vld [vmem:[%s167] sm:$0xff]
    %s169 = scalar_lea.vmem %s0, 328
    %v170 = vld [vmem:[%s169] sm:$0xff]
    %vm171 = vcmp.gt.f32.partialorder %v170, %v168
    %v172 = vsel %vm171, 1.0, 0.0
    %v173 = vsel %vm171, %v170, %v168
    %s174 = scalar_lea.vmem %s0, 336
    %v175 = vld [vmem:[%s174] sm:$0xff]
    %vm176 = vcmp.gt.f32.partialorder %v175, %v173
    %v177 = vsel %vm176, 2.0, %v172
    %v178 = vsel %vm176, %v175, %v173
    %s179 = scalar_lea.vmem %s0, 344
    %v180 = vld [vmem:[%s179] sm:$0xff]
    %vm181 = vcmp.gt.f32.partialorder %v180, %v178
    %v182 = vsel %vm181, 3.0, %v177
    %v183 = vsel %vm181, %v180, %v178
    %s184 = scalar_lea.vmem %s0, 352
    %v185 = vld [vmem:[%s184] sm:$0xff]
    %vm186 = vcmp.gt.f32.partialorder %v185, %v183
    %v187 = vsel %vm186, 4.0, %v182
    %v188 = vsel %vm186, %v185, %v183
    %s189 = scalar_lea.vmem %s0, 360
    %v190 = vld [vmem:[%s189] sm:$0xff]
    %vm191 = vcmp.gt.f32.partialorder %v190, %v188
    %v192 = vsel %vm191, 5.0, %v187
    %v193 = vsel %vm191, %v190, %v188
    %s194 = scalar_lea.vmem %s0, 368
    %v195 = vld [vmem:[%s194] sm:$0xff]
    %vm196 = vcmp.gt.f32.partialorder %v195, %v193
    %v197 = vsel %vm196, 6.0, %v192
    %v198 = vsel %vm196, %v195, %v193
    %s199 = scalar_lea.vmem %s0, 376
    %v200 = vld [vmem:[%s199] sm:$0xff]
    %vm201 = vcmp.gt.f32.partialorder %v200, %v198
    %v202 = vsel %vm201, 7.0, %v197
    %v203 = vsel %vm201, %v200, %v198
    %s204 = scalar_lea.vmem %s0, 384
    %v205 = vld [vmem:[%s204] sm:$0xff]
    %vm206 = vcmp.gt.f32.partialorder %v205, %v203
    %v207 = vsel %vm206, 8.0, %v202
    %v208 = vsel %vm206, %v205, %v203
    %s209 = scalar_lea.vmem %s0, 392
    %v210 = vld [vmem:[%s209] sm:$0xff]
    %vm211 = vcmp.gt.f32.partialorder %v210, %v208
    %v212 = vsel %vm211, 9.0, %v207
    %v213 = vsel %vm211, %v210, %v208
    %s214 = scalar_lea.vmem %s0, 400
    %v215 = vld [vmem:[%s214] sm:$0xff]
    %vm216 = vcmp.gt.f32.partialorder %v215, %v213
    %v217 = vsel %vm216, 10.0, %v212
    %v218 = vsel %vm216, %v215, %v213
    %s219 = scalar_lea.vmem %s0, 408
    %v220 = vld [vmem:[%s219] sm:$0xff]
    %vm221 = vcmp.gt.f32.partialorder %v220, %v218
    %v222 = vsel %vm221, 11.0, %v217
    %v223 = vsel %vm221, %v220, %v218
    %s224 = scalar_lea.vmem %s0, 416
    %v225 = vld [vmem:[%s224] sm:$0xff]
    %vm226 = vcmp.gt.f32.partialorder %v225, %v223
    %v227 = vsel %vm226, 12.0, %v222
    %v228 = vsel %vm226, %v225, %v223
    %s229 = scalar_lea.vmem %s0, 424
    %v230 = vld [vmem:[%s229] sm:$0xff]
    %vm231 = vcmp.gt.f32.partialorder %v230, %v228
    %v232 = vsel %vm231, 13.0, %v227
    %v233 = vsel %vm231, %v230, %v228
    %s234 = scalar_lea.vmem %s0, 432
    %v235 = vld [vmem:[%s234] sm:$0xff]
    %vm236 = vcmp.gt.f32.partialorder %v235, %v233
    %v237 = vsel %vm236, 14.0, %v232
    %v238 = vsel %vm236, %v235, %v233
    %s239 = scalar_lea.vmem %s0, 440
    %v240 = vld [vmem:[%s239] sm:$0xff]
    %vm241 = vcmp.gt.f32.partialorder %v240, %v238
    %v242 = vsel %vm241, 15.0, %v237
    %v243 = vsel %vm241, %v240, %v238
    %s244 = scalar_lea.vmem %s0, 448
    %v245 = vld [vmem:[%s244] sm:$0xff]
    %vm246 = vcmp.gt.f32.partialorder %v245, %v243
    %v247 = vsel %vm246, 16.0, %v242
    %v248 = vsel %vm246, %v245, %v243
    %s249 = scalar_lea.vmem %s0, 456
    %v250 = vld [vmem:[%s249] sm:$0xff]
    %vm251 = vcmp.gt.f32.partialorder %v250, %v248
    %v252 = vsel %vm251, 17.0, %v247
    %v253 = vsel %vm251, %v250, %v248
    %s254 = scalar_lea.vmem %s0, 464
    %v255 = vld [vmem:[%s254] sm:$0xff]
    %vm256 = vcmp.gt.f32.partialorder %v255, %v253
    %v257 = vsel %vm256, 18.0, %v252
    %v258 = vsel %vm256, %v255, %v253
    %s259 = scalar_lea.vmem %s0, 472
    %v260 = vld [vmem:[%s259] sm:$0xff]
    %vm261 = vcmp.gt.f32.partialorder %v260, %v258
    %v262 = vsel %vm261, 19.0, %v257
    %v263 = vxor.u32 %v166, 2147483648
    %v264 = vmul.f32 %v263, 1.442695
    %v265 = vpow.pop %v264
    %v266 = vadd.f32 %v265, 1.0
    %v267 = vrcp.pop %v266
    %v268 = vmul.f32 1.0, %v267
    %v269 = vxor.u32 %v156, 2147483648
    %v270 = vmul.f32 %v269, 1.442695
    %v271 = vpow.pop %v270
    %v272 = vadd.f32 %v271, 1.0
    %v273 = vrcp.pop %v272
    %v274 = vmul.f32 1.0, %v273
    %v275 = vxor.u32 %v159, 2147483648
    %v276 = vmul.f32 %v275, 1.442695
    %v277 = vpow.pop %v276
    %v278 = vadd.f32 %v277, 1.0
    %v279 = vrcp.pop %v278
    %v280 = vmul.f32 1.0, %v279
    %v281 = vxor.u32 %v162, 2147483648
    %v282 = vmul.f32 %v281, 1.442695
    %v283 = vpow.pop %v282
    %v284 = vadd.f32 %v283, 1.0
    %v285 = vrcp.pop %v284
    %v286 = vmul.f32 1.0, %v285
    %v287 = vxor.u32 %v165, 2147483648
    %v288 = vmul.f32 %v287, 1.442695
    %v289 = vpow.pop %v288
    %v290 = vadd.f32 %v289, 1.0
    %v291 = vrcp.pop %v290
    %v292 = vmul.f32 1.0, %v291
    %v293 = vadd.f32 %v274, %v14
    %v294 = vmul.f32 %v293, 64.0
    %v295 = vadd.f32 %v280, %v12
    %v296 = vmul.f32 %v295, 64.0
    %v297 = vmul.f32 %v286, 224.0
    %v298 = vmul.f32 %v292, 224.0
    %s299 = scalar_lea.vmem [#allocation2], 48
    %300 = vst [vmem:[%s299] sm:$0xff] %v262
    %s301 = scalar_lea.vmem [#allocation2], 56
    %302 = vst [vmem:[%s301] sm:$0xff] %v268
    %v303 = vsub.f32 %v294, %v297
    %s304 = scalar_lea.vmem [#allocation2], 64
    %305 = vst [vmem:[%s304] sm:$0xff] %v303
    %v306 = vsub.f32 %v296, %v298
    %s307 = scalar_lea.vmem [#allocation2], 72
    %308 = vst [vmem:[%s307] sm:$0xff] %v306
    %v309 = vadd.f32 %v294, %v297
    %s310 = scalar_lea.vmem [#allocation2], 80
    %311 = vst [vmem:[%s310] sm:$0xff] %v309
    %v312 = vadd.f32 %v296, %v298
    %s313 = scalar_lea.vmem [#allocation2], 88
    %314 = vst [vmem:[%s313] sm:$0xff] %v312
    // Predicated region
    $region10: #{_decode_device.1} parent=1 // pred_check
      _
    $region11: #{_decode_device.1} parent=1 // pred_check_branch
      %316 = sbr.rel (0) target = $region13
    $region12: #{_decode_device.1} parent=1 // pred_region
      %s318 = ssub.s32 1536, 1536
      %319 = vsyncadd [#allocation3], %s318
      %s320 = sshll.u32 [#allocation2], 4
      %s321 = int_to_ptr.vmem [resolvable:$true] %s320
      %326 = dma.vmem_to_hbm [thread:$0]  %s321, 1536, %s2, [#allocation3], 128, 128, 8
    $region13: #{_decode_device.1} parent=1 // pred_fallthru
      _
    // Predicated region
    $region14: #{_decode_device.1} parent=1 // pred_check
      _
    $region15: #{_decode_device.1} parent=1 // pred_check_branch
      %328 = sbr.rel (0) target = $region17
    $region16: #{_decode_device.1} parent=1 // pred_region
      %329 = dma.done [#allocation3], 1536
    $region17: #{_decode_device.1} parent=1 // pred_fallthru
      _
    %330 = vsyncpa [#allocation3], 1

</llo_original>
